<compile_context>
chip_gen: v7x
topology: tpu7x:2x2x1
jax: 0.10.0
libtpu: 0.0.40
codegen_flags: <defaults>
</compile_context>

<pallas_src>
import jax
import jax.numpy as jnp
from jax.experimental import pallas as pl
from jax.experimental.pallas import tpu as pltpu


def _round_up(v, m):
    return (v + m - 1) // m * m


def class_head_kernel(x_ref, w_ref, b_ref, o_ref):
    # x_ref: (C, t_hw), w_ref: (N, C), b_ref: (N, 128), o_ref: (N, t_hw)
    acc = jnp.dot(w_ref[...], x_ref[...], preferred_element_type=jnp.float32)
    bias_col = b_ref[...][:, :1]                       # (N, 1) -> lane broadcast
    o_ref[...] = (acc + bias_col).astype(o_ref.dtype)


def _pick_tile(C, N, in_itemsize, out_itemsize, hw,
               max_tile=2048, vmem_budget=12 * 1024 * 1024):
    """Largest multiple-of-128 spatial tile whose double-buffered working set
    stays comfortably under the smallest (v5e, 16 MiB) default scoped VMEM."""
    per_col = 2 * (C * in_itemsize + N * out_itemsize)   # 2x = double buffering
    t = (vmem_budget // per_col) // 128 * 128
    t = max(128, min(max_tile, t))
    return min(t, _round_up(hw, 128))


def class_head_forward(x_nchw, weight, bias, num_anchors=2, compute_dtype=None):
    """ClassHead forward.

    x_nchw: (B, C, H, W)   activations (NCHW, as in the PyTorch module)
    weight: (N, C)         conv1x1 weight (PyTorch (N, C, 1, 1) squeezed)
    bias:   (N,)           conv1x1 bias
    returns (B, H*W*num_anchors, 2), identical to the PyTorch module output.
    """
    B, C, H, W = x_nchw.shape
    N = num_anchors * 2
    assert weight.shape == (N, C) and bias.shape == (N,)

    out_dtype = x_nchw.dtype
    if compute_dtype is not None:
        # bandwidth-bound kernel: optional bf16 inputs halve HBM traffic;
        # accumulation stays f32 via preferred_element_type.
        x_nchw = x_nchw.astype(compute_dtype)
        weight = weight.astype(compute_dtype)

    HW = H * W
    x3 = x_nchw.reshape(B, C, HW)                  # free, contiguous view of NCHW

    t_hw = _pick_tile(C, N, x3.dtype.itemsize, jnp.dtype(out_dtype).itemsize, HW)
    HW_pad = _round_up(HW, t_hw)
    if HW_pad != HW:
        # pad the spatial axis so every grid step sees a full lane-dense tile
        x3 = jnp.pad(x3, ((0, 0), (0, 0), (0, HW_pad - HW)))

    # bias pre-broadcast to a lane-dense (N, 128) block (tiny, VMEM-resident)
    bias_pad = jnp.broadcast_to(bias.astype(jnp.float32)[:, None], (N, 128))

    grid = (B, HW_pad // t_hw)

    out_bnp = pl.pallas_call(
        class_head_kernel,
        out_shape=jax.ShapeDtypeStruct((B, N, HW_pad), out_dtype),
        grid_spec=pltpu.PrefetchScalarGridSpec(
            num_scalar_prefetch=0,
            grid=grid,
            in_specs=[
                # activations: (C, t_hw) tiles, batch dim squeezed out
                pl.BlockSpec((None, C, t_hw), lambda b, j: (b, 0, j)),
                # small weight / bias: constant index_map -> fetched once
                pl.BlockSpec((N, C), lambda b, j: (0, 0)),
                pl.BlockSpec((N, 128), lambda b, j: (0, 0)),
            ],
            out_specs=pl.BlockSpec((None, N, t_hw), lambda b, j: (b, 0, j)),
        ),
        compiler_params=pltpu.CompilerParams(
            dimension_semantics=("parallel", "parallel")),
    )(x3, weight, bias_pad)

    # tiny epilogue on the (B, N, HW) result (N=4): matches permute(0,2,3,1)+view
    out_bnp = out_bnp[:, :, :HW]
    return jnp.transpose(out_bnp, (0, 2, 1)).reshape(B, HW * num_anchors, 2)


if __name__ == "__main__":
    # Small shapes consistent with the module (inchannels scaled down from 512).
    B, C, H, W = 2, 32, 16, 16
    num_anchors = 2
    N = num_anchors * 2

    key = jax.random.PRNGKey(0)
    kx, kw, kb = jax.random.split(key, 3)
    x = jax.random.normal(kx, (B, C, H, W), dtype=jnp.float32)
    # PyTorch conv1x1 weight (N, C, 1, 1) squeezed to (N, C); bias (N,)
    weight = jax.random.normal(kw, (N, C), dtype=jnp.float32) * 0.05
    bias = jax.random.normal(kb, (N,), dtype=jnp.float32) * 0.05

    out = class_head_forward(x, weight, bias, num_anchors=num_anchors)
    out = jax.block_until_ready(out)

    # Pure-JAX reference of the same math (conv1x1 + permute + view).
    x2 = x.reshape(B, C, H * W)
    ref = jnp.einsum("nc,bcp->bnp", weight, x2) + bias[None, :, None]
    ref = jnp.transpose(ref, (0, 2, 1)).reshape(B, H * W * num_anchors, 2)

    assert out.shape == (B, H * W * num_anchors, 2)
    assert jnp.allclose(out, ref, atol=1e-5, rtol=1e-5)

    # Optional bandwidth-optimized bf16 path (f32 accumulate), looser tolerance.
    out_bf16 = class_head_forward(x, weight, bias, num_anchors=num_anchors,
                                  compute_dtype=jnp.bfloat16)
    out_bf16 = jax.block_until_ready(out_bf16)
    assert jnp.allclose(out_bf16.astype(jnp.float32), ref, atol=2e-2, rtol=2e-2)

    print("KERNEL_OK")
</pallas_src>

<mosaic_0001>
module attributes {stable_mosaic.version = 11 : i64} {
  func.func @class_head_kernel(%arg0: i32, %arg1: i32, %arg2: memref<1x32x256xf32, #tpu.memory_space<vmem>>, %arg3: memref<4x32xf32, #tpu.memory_space<vmem>>, %arg4: memref<4x128xf32, #tpu.memory_space<vmem>>, %arg5: memref<1x4x256xf32, #tpu.memory_space<vmem>>) attributes {dimension_semantics = [#tpu.dimension_semantics<parallel>, #tpu.dimension_semantics<parallel>], iteration_bounds = array<i64: 2, 1>, scalar_prefetch = 0 : i64, scratch_operands = 0 : i64, tpu.core_type = #tpu.core_type<tc>, window_params = [{transform_indices = @transform_0, window_bounds = array<i64: 1, 32, 256>}, {pipeline_mode = #tpu.pipeline_mode<synchronous>, transform_indices = @transform_1, window_bounds = array<i64: 4, 32>}, {pipeline_mode = #tpu.pipeline_mode<synchronous>, transform_indices = @transform_2, window_bounds = array<i64: 4, 128>}, {transform_indices = @transform_3, window_bounds = array<i64: 1, 4, 256>}]} {
    %c0 = arith.constant 0 : index
    %c0_0 = arith.constant 0 : index
    %0 = vector.load %arg3[%c0, %c0_0] : memref<4x32xf32, #tpu.memory_space<vmem>>, vector<4x32xf32>
    %c0_1 = arith.constant 0 : index
    %c0_2 = arith.constant 0 : index
    %c0_3 = arith.constant 0 : index
    %1 = vector.load %arg2[%c0_1, %c0_2, %c0_3] : memref<1x32x256xf32, #tpu.memory_space<vmem>>, vector<1x32x256xf32>
    %2 = vector.shape_cast %1 : vector<1x32x256xf32> to vector<32x256xf32>
    %cst = arith.constant dense<0.000000e+00> : vector<4x256xf32>
    %3 = tpu.matmul %0, %2, %cst {dimension_numbers = #tpu.dot_dimension_numbers<[1], [0], [0], [1], [0, 0, 1, 1], [], []>} : vector<4x32xf32>, vector<32x256xf32>, vector<4x256xf32> -> vector<4x256xf32>
    %c0_4 = arith.constant 0 : index
    %c0_5 = arith.constant 0 : index
    %4 = vector.load %arg4[%c0_4, %c0_5] : memref<4x128xf32, #tpu.memory_space<vmem>>, vector<4x128xf32>
    %5 = vector.extract_strided_slice %4 {offsets = [0, 0], sizes = [4, 1], strides = [1, 1]} : vector<4x128xf32> to vector<4x1xf32>
    %6 = vector.broadcast %5 : vector<4x1xf32> to vector<4x256xf32>
    %7 = arith.addf %3, %6 : vector<4x256xf32>
    %c0_6 = arith.constant 0 : index
    %c0_7 = arith.constant 0 : index
    %c0_8 = arith.constant 0 : index
    %8 = vector.load %arg5[%c0_6, %c0_7, %c0_8] : memref<1x4x256xf32, #tpu.memory_space<vmem>>, vector<1x4x256xf32>
    %9 = vector.shape_cast %8 : vector<1x4x256xf32> to vector<4x256xf32>
    %10 = vector.shape_cast %7 : vector<4x256xf32> to vector<1x4x256xf32>
    tpu.vector_store %arg5[%c0_6, %c0_7, %c0_8], %10 {strides = array<i32>} : memref<1x4x256xf32, #tpu.memory_space<vmem>>, vector<1x4x256xf32>,
    return
  }
  func.func @transform_0(%arg0: i32, %arg1: i32) -> (i32, i32, i32) {
    %c0_i32 = arith.constant 0 : i32
    %c0_i32_0 = arith.constant 0 : i32
    return %arg0, %c0_i32, %arg1 : i32, i32, i32
  }
  func.func @transform_1(%arg0: i32, %arg1: i32) -> (i32, i32) {
    %c0_i32 = arith.constant 0 : i32
    %c0_i32_0 = arith.constant 0 : i32
    %c0_i32_1 = arith.constant 0 : i32
    return %c0_i32, %c0_i32_0 : i32, i32
  }
  func.func @transform_2(%arg0: i32, %arg1: i32) -> (i32, i32) {
    %c0_i32 = arith.constant 0 : i32
    %c0_i32_0 = arith.constant 0 : i32
    %c0_i32_1 = arith.constant 0 : i32
    return %c0_i32, %c0_i32_0 : i32, i32
  }
  func.func @transform_3(%arg0: i32, %arg1: i32) -> (i32, i32, i32) {
    %c0_i32 = arith.constant 0 : i32
    %c0_i32_0 = arith.constant 0 : i32
    return %arg0, %c0_i32, %arg1 : i32, i32, i32
  }
}

</mosaic_0001>

<llo_original>
// kernel: tpu_custom_call.1
$region0: #{tpu_custom_call.1}
  #allocation0 [shape = 'u32[]', space=smem, size = 0x4, offset = 0x4, fixed_abs, tag = 'smem constant byte address 0x4 - core index']
  #allocation1 [shape = 'u32[144,128]{1,0:T(1,128)}', space=vmem, size = 0x12000, scoped, tag = 'internal scratch']
  %s0 = inlined_call_operand.hbm [shape: f32[2,32,256], index: 0, kind: input, shape index: {}]
  %s1 = inlined_call_operand.hbm [shape: f32[4,32], index: 1, kind: input, shape index: {}]
  %s2 = inlined_call_operand.vmem [shape: f32[4,128], index: 2, kind: input, shape index: {}]
  %s3 = inlined_call_operand.hbm [shape: f32[2,4,256], index: 3, kind: output, shape index: {}]
  %s4 = sld [smem:[#allocation0]]
  $region53: #{tpu_custom_call.1} parent=0
    _
  %s6 = ssub.s32 1, %s4
  %s7 = scalar_select 0, %s6, %s4
  $region1: #{tpu_custom_call.1} parent=0
    #allocation2 [shape = 'u8[65536]{0}', space=vmem, size = 0x10000, scoped, tag = 'input window, operand 0']
    #allocation3 [shape = 's32[2]{0}', space=sflag, size = 0x8, scoped, tag = 'scoped memory for tpu_custom_call.1']
    #allocation4 [shape = 's32[2]{0}', space=sflag, size = 0x8, scoped, tag = 'scoped memory for tpu_custom_call.1']
    #allocation5 [shape = 'u8[2048]{0}', space=vmem, size = 0x800, scoped, tag = 'input window, operand 1, single buffered']
    #allocation6 [shape = 's32[1]{0}', space=sflag, size = 0x4, scoped, tag = 'scoped memory for tpu_custom_call.1']
    #allocation7 [shape = 'u8[8192]{0}', space=vmem, size = 0x2000, scoped, tag = 'output window, operand 0']
    %8 = vsyncpa [#allocation3], 0
    %s9 = scalar_lea.sflag [#allocation3], 1
    %10 = vsyncpa %s9, 0
    %11 = vsyncpa [#allocation6], 0
    %12 = vsyncpa [#allocation4], 0
    %s13 = scalar_lea.sflag [#allocation4], 1
    %14 = vsyncpa %s13, 0
    loop: start=0, step=1, limit=4
    $region2: #{tpu_custom_call.1} parent=1 // loop_pre_header
      _
    $region3: #{tpu_custom_call.1} parent=1 // loop_header
      %s16 = sphi 0, %s20
      %p17 = scmp.ge.s32.totalorder %s16, 4
      %s23 = sphi 0, %s35
      %s24 = sphi 0, %s31
      %s25 = sphi 0, %s23
      %s26 = sphi 0, %s24
      %s27 = sphi 0, %s25
      %s28 = sphi 0, %s26
      %s40 = sphi 0, %s42
      %s43 = sphi 0, %s40
      %s44 = sphi 0, %s43
      %s60 = sphi 0, %s44
      %s64 = sphi 0, %s64
      %s66 = sphi 0, %s64
      %s67 = sphi 0, %s66
      %s81 = sphi 0, %s67
      %s85 = sphi 0, %s85
      %s87 = sphi 0, %s85
      %s88 = sphi 0, %s87
      %s102 = sphi 0, %s88
      %s110 = sphi 0, %s112
      %s113 = sphi 0, %s110
      %s114 = sphi 0, %s113
      %s130 = sphi 0, %s114
    $region4: #{tpu_custom_call.1} parent=1 // loop_header_branch
      %19 = sbr.rel (%p17) target = $region8
    $region5: #{tpu_custom_call.1} parent=1 // loop_body
      %s21 = ssub.s32 %s16, 1
      %s22 = ssub.s32 %s16, 2
      %s29 = sadd.s32 1, %s24
      %p30 = scmp.ge.s32.totalorder %s29, 1
      %s31 = scalar_select %p30, 0, %s29
      %s32 = sadd.s32 1, %s23
      %s33 = scalar_select %p30, %s32, %s23
      %p34 = scmp.ge.s32.totalorder %s33, 2
      %s35 = scalar_select %p34, 0, %s33
      %s36 = ssub.s32 %s23, %s35
      %s37 = ssub.s32 %s24, %s31
      %s38 = sor.u32 %s36, %s37
      %p39 = scmp.eq.s32.totalorder %s38, 0
      %s41 = sadd.s32 %s40, 1
      %s42 = scalar_select %p39, %s40, %s41
      %p45 = pneg %p39
      %p46 = scmp.eq.s32.totalorder %s16, 1
      %p47 = por %p45, %p46
      %p48 = scmp.ne.s32.totalorder %s40, %s43
      %p49 = scmp.eq.s32.totalorder %s16, 0
      %p50 = por %p48, %p49
      %p51 = scmp.ne.s32.totalorder %s40, %s43
      %p52 = scmp.eq.s32.totalorder %s21, 1
      %p53 = por %p51, %p52
      %p54 = scmp.ne.s32.totalorder %s43, %s44
      %p55 = scmp.eq.s32.totalorder %s21, 0
      %p56 = por %p54, %p55
      %p57 = scmp.ne.s32.totalorder %s43, %s44
      %p58 = scmp.eq.s32.totalorder %s22, 1
      %p59 = por %p57, %p58
      %p61 = scmp.ne.s32.totalorder %s44, %s60
      %p62 = scmp.eq.s32.totalorder %s22, 0
      %p63 = por %p61, %p62
      %s65 = sadd.s32 %s64, 1
      %p68 = scmp.eq.s32.totalorder %s16, 1
      %p69 = scmp.ne.s32.totalorder %s64, %s66
      %p70 = scmp.eq.s32.totalorder %s16, 0
      %p71 = por %p69, %p70
      %p72 = scmp.ne.s32.totalorder %s64, %s66
      %p73 = scmp.eq.s32.totalorder %s21, 1
      %p74 = por %p72, %p73
      %p75 = scmp.ne.s32.totalorder %s66, %s67
      %p76 = scmp.eq.s32.totalorder %s21, 0
      %p77 = por %p75, %p76
      %p78 = scmp.ne.s32.totalorder %s66, %s67
      %p79 = scmp.eq.s32.totalorder %s22, 1
      %p80 = por %p78, %p79
      %p82 = scmp.ne.s32.totalorder %s67, %s81
      %p83 = scmp.eq.s32.totalorder %s22, 0
      %p84 = por %p82, %p83
      %s86 = sadd.s32 %s85, 1
      %p89 = scmp.eq.s32.totalorder %s16, 1
      %p90 = scmp.ne.s32.totalorder %s85, %s87
      %p91 = scmp.eq.s32.totalorder %s16, 0
      %p92 = por %p90, %p91
      %p93 = scmp.ne.s32.totalorder %s85, %s87
      %p94 = scmp.eq.s32.totalorder %s21, 1
      %p95 = por %p93, %p94
      %p96 = scmp.ne.s32.totalorder %s87, %s88
      %p97 = scmp.eq.s32.totalorder %s21, 0
      %p98 = por %p96, %p97
      %p99 = scmp.ne.s32.totalorder %s87, %s88
      %p100 = scmp.eq.s32.totalorder %s22, 1
      %p101 = por %p99, %p100
      %p103 = scmp.ne.s32.totalorder %s88, %s102
      %p104 = scmp.eq.s32.totalorder %s22, 0
      %p105 = por %p103, %p104
      %s106 = ssub.s32 %s23, %s35
      %s107 = ssub.s32 %s24, %s31
      %s108 = sor.u32 %s106, %s107
      %p109 = scmp.eq.s32.totalorder %s108, 0
      %s111 = sadd.s32 %s110, 1
      %s112 = scalar_select %p109, %s110, %s111
      %p115 = pneg %p109
      %p116 = scmp.eq.s32.totalorder %s16, 1
      %p117 = por %p115, %p116
      %p118 = scmp.ne.s32.totalorder %s110, %s113
      %p119 = scmp.eq.s32.totalorder %s16, 0
      %p120 = por %p118, %p119
      %p121 = scmp.ne.s32.totalorder %s110, %s113
      %p122 = scmp.eq.s32.totalorder %s21, 1
      %p123 = por %p121, %p122
      %p124 = scmp.ne.s32.totalorder %s113, %s114
      %p125 = scmp.eq.s32.totalorder %s21, 0
      %p126 = por %p124, %p125
      %p127 = scmp.ne.s32.totalorder %s113, %s114
      %p128 = scmp.eq.s32.totalorder %s22, 1
      %p129 = por %p127, %p128
      %p131 = scmp.ne.s32.totalorder %s114, %s130
      %p132 = scmp.eq.s32.totalorder %s22, 0
      %p133 = por %p131, %p132
      %p134 = scmp.le.s32.totalorder 1, %s16
      %p135 = scmp.lt.s32.totalorder %s16, 3
      %p136 = pnand %p134, %p135
      %p137 = pneg %p136
      // Predicated region
      $region9: #{tpu_custom_call.1} parent=5 // pred_check
        _
      $region10: #{tpu_custom_call.1} parent=5 // pred_check_branch
        %139 = sbr.rel (%p136) target = $region12
      $region11: #{tpu_custom_call.1} parent=5 // pred_region
        %s140 = ssub.s32 %s16, 1
        // Predicated region
        $region13: #{tpu_custom_call.1} parent=11 // pred_check
          %p141 = pneg %p77
        $region14: #{tpu_custom_call.1} parent=11 // pred_check_branch
          %143 = sbr.rel (%p141) target = $region16
        $region15: #{tpu_custom_call.1} parent=11 // pred_region
          %s145 = ssub.s32 64, 64
          %146 = vsyncadd [#allocation6], %s145
          %s148 = sshll.u32 [#allocation5], 4
          %s149 = int_to_ptr.vmem [resolvable:$true] %s148
          %151 = dma.hbm_to_vmem [thread:$0]  %s1, 64, %s149, [#allocation6]
        $region16: #{tpu_custom_call.1} parent=11 // pred_fallthru
          _
        // Predicated region
        $region17: #{tpu_custom_call.1} parent=11 // pred_check
          %p152 = pneg %p98
        $region18: #{tpu_custom_call.1} parent=11 // pred_check_branch
          %154 = sbr.rel (%p152) target = $region20
        $region19: #{tpu_custom_call.1} parent=11 // pred_region
          _
        $region20: #{tpu_custom_call.1} parent=11 // pred_fallthru
          _
      $region12: #{tpu_custom_call.1} parent=5 // pred_fallthru
        _
      %p155 = scmp.lt.s32.totalorder %s16, 2
      // Predicated region
      $region21: #{tpu_custom_call.1} parent=5 // pred_check
        %p156 = pneg %p155
      $region22: #{tpu_custom_call.1} parent=5 // pred_check_branch
        %158 = sbr.rel (%p156) target = $region24
      $region23: #{tpu_custom_call.1} parent=5 // pred_region
        // Predicated region
        $region25: #{tpu_custom_call.1} parent=23 // pred_check
          %p159 = pneg %p50
        $region26: #{tpu_custom_call.1} parent=23 // pred_check_branch
          %161 = sbr.rel (%p159) target = $region28
        $region27: #{tpu_custom_call.1} parent=23 // pred_region
          %s162 = sand.u32 %s40, 1
          %s163 = scalar_lea.sflag [#allocation3], %s162
          %s164 = sand.u32 %s40, 1
          %s165 = smul.addr %s164, 64
          %s166 = scalar_lea.vmem [#allocation2], %s165
          %s167 = smul.u32 2, %s24
          %s169 = ssub.s32 1024, 1024
          %170 = vsyncadd %s163, %s169
          %s171 = smul.addr %s23, 8
          %s172 = sadd.s32 %s167, %s171
          %s173 = smul.addr %s172, 128
          %s174 = scalar_lea.hbm %s0, %s173
          %s175 = sshll.u32 %s166, 4
          %s176 = int_to_ptr.vmem [resolvable:$true] %s175
          %181 = dma.hbm_to_vmem [thread:$0]  %s174, 1024, %s176, %s163, 256, 256, 16
        $region28: #{tpu_custom_call.1} parent=23 // pred_fallthru
          _
      $region24: #{tpu_custom_call.1} parent=5 // pred_fallthru
        _
      %p182 = scmp.le.s32.totalorder 1, %s16
      %p183 = scmp.lt.s32.totalorder %s16, 3
      %p184 = pnand %p182, %p183
      %p185 = pneg %p184
      // Predicated region
      $region29: #{tpu_custom_call.1} parent=5 // pred_check
        _
      $region30: #{tpu_custom_call.1} parent=5 // pred_check_branch
        %187 = sbr.rel (%p184) target = $region32
      $region31: #{tpu_custom_call.1} parent=5 // pred_region
        %s188 = ssub.s32 %s16, 1
        %s189 = sand.u32 %s43, 1
        %s190 = scalar_lea.sflag [#allocation3], %s189
        %s191 = sand.u32 %s43, 1
        %s192 = smul.addr %s191, 64
        %s193 = scalar_lea.vmem [#allocation2], %s192
        // Predicated region
        $region33: #{tpu_custom_call.1} parent=31 // pred_check
          %p194 = pneg %p56
        $region34: #{tpu_custom_call.1} parent=31 // pred_check_branch
          %196 = sbr.rel (%p194) target = $region36
        $region35: #{tpu_custom_call.1} parent=31 // pred_region
          %197 = dma.done %s190, 1024
        $region36: #{tpu_custom_call.1} parent=31 // pred_fallthru
          _
        // Predicated region
        $region37: #{tpu_custom_call.1} parent=31 // pred_check
          %p198 = pneg %p77
        $region38: #{tpu_custom_call.1} parent=31 // pred_check_branch
          %200 = sbr.rel (%p198) target = $region40
        $region39: #{tpu_custom_call.1} parent=31 // pred_region
          %201 = dma.done [#allocation6], 64
        $region40: #{tpu_custom_call.1} parent=31 // pred_fallthru
          _
        %s202 = sand.u32 %s43, 1
        %s203 = scalar_lea.sflag [#allocation3], %s202
        %s204 = sand.u32 %s43, 1
        %s205 = smul.addr %s204, 64
        %s206 = scalar_lea.vmem [#allocation2], %s205
        %p207 = pneg %p56
        %p208 = pneg %p53
        %p209 = pneg %p77
        %p210 = pneg %p74
        %p211 = pneg %p98
        %p212 = pneg %p95
        %p213 = pneg %p126
        %p214 = pneg %p123
        %s215 = sand.u32 %s113, 1
        %s216 = scalar_lea.sflag [#allocation4], %s215
        %s217 = sand.u32 %s113, 1
        %s218 = smul.addr %s217, 8
        %s219 = scalar_lea.vmem [#allocation7], %s218
        %s220 = smul.u32 2, %s26
        %s221 = smul.u32 2, %s26
        %v222 = vld [vmem:[#allocation5] sm:$0xf]
        %v223 = vld [vmem:[%s193] sm:$0xff]
        %v224 = vld [vmem:[%s193 + $0x8] sm:$0xff]
        %v225 = vld [vmem:[%s193 + $0x10] sm:$0xff]
        %v226 = vld [vmem:[%s193 + $0x18] sm:$0xff]
        %v227 = vld [vmem:[%s193 + $0x20] sm:$0xff]
        %v228 = vld [vmem:[%s193 + $0x28] sm:$0xff]
        %v229 = vld [vmem:[%s193 + $0x30] sm:$0xff]
        %v230 = vld [vmem:[%s193 + $0x38] sm:$0xff]
        %v231 = vld [vmem:[%s2] sm:$0xf]
        %233 = vset.pattern.permute.xlu0 0
        %234 = vperm.xlu0 %233, %v231
        %v235 = vpop.permute.xlu0 %234
        %vm237 = vcmask 261120
        %v239 = vsel %vm237, %v222, 0
        %241 = vmatprep.subr.mxu0 %v224
        %242 = vmatpush1.msra.mxu0 %v223
        %243 = vmatprep.subr.mxu0 %v226
        %244 = vmatpush1.msra.mxu0 %v225
        %245 = vmatprep.subr.mxu0 %v228
        %246 = vmatpush1.msra.mxu0 %v227
        %247 = vmatprep.subr.mxu0 %v230
        %248 = vmatpush1.msra.mxu0 %v229
        %249 = vmatprep.subr.mxu0 0.0
        %250 = vmatpush1.msra.mxu0 0.0
        %251 = vmatprep.subr.mxu0 0.0
        %252 = vmatpush1.msra.mxu0 0.0
        %253 = vmatprep.subr.mxu0 0.0
        %254 = vmatpush1.msra.mxu0 0.0
        %255 = vmatprep.subr.mxu0 0.0
        %256 = vmatpush1.msra.mxu0 0.0
        %257 = vmatprep.subr.mxu0 0.0
        %258 = vmatpush1.msra.mxu0 0.0
        %259 = vmatprep.subr.mxu0 0.0
        %260 = vmatpush1.msra.mxu0 0.0
        %261 = vmatprep.subr.mxu0 0.0
        %262 = vmatpush1.msra.mxu0 0.0
        %263 = vmatprep.subr.mxu0 0.0
        %264 = vmatpush1.msra.mxu0 0.0
        %265 = vmatprep.subr.mxu0 0.0
        %266 = vmatpush1.msra.mxu0 0.0
        %267 = vmatprep.subr.mxu0 0.0
        %268 = vmatpush1.msra.mxu0 0.0
        %269 = vmatprep.subr.mxu0 0.0
        %270 = vmatpush1.msra.mxu0 0.0
        %271 = vmatprep.subr.mxu0 0.0
        %272 = vmatpush1.msra.mxu0 0.0
        %273 = vmatprep.subr.mxu0 0.0
        %274 = vmatpush1.msra.mxu0 0.0
        %275 = vmatprep.subr.mxu0 0.0
        %276 = vmatpush1.msra.mxu0 0.0
        %277 = vmatprep.subr.mxu0 0.0
        %278 = vmatpush1.msra.mxu0 0.0
        %279 = vmatprep.subr.mxu0 0.0
        %280 = vmatpush1.msra.mxu0 0.0
        %281 = vmatprep.subr.mxu0 0.0
        %282 = vmatpush1.msra.mxu0 0.0
        %283 = vmatprep.subr.mxu0 0.0
        %284 = vmatpush1.msra.mxu0 0.0
        %285 = vmatprep.subr.mxu0 0.0
        %286 = vmatpush1.msra.mxu0 0.0
        %287 = vmatprep.subr.mxu0 0.0
        %288 = vmatpush1.msra.mxu0 0.0
        %289 = vmatprep.subr.mxu0 0.0
        %290 = vmatpush1.msra.mxu0 0.0
        %291 = vmatprep.subr.mxu0 0.0
        %292 = vmatpush1.msra.mxu0 0.0
        %293 = vmatprep.subr.mxu0 0.0
        %294 = vmatpush1.msra.mxu0 0.0
        %295 = vmatprep.subr.mxu0 0.0
        %296 = vmatpush1.msra.mxu0 0.0
        %297 = vmatprep.subr.mxu0 0.0
        %298 = vmatpush1.msra.mxu0 0.0
        %299 = vmatprep.subr.mxu0 0.0
        %300 = vmatpush1.msra.mxu0 0.0
        %301 = vmatprep.subr.mxu0 0.0
        %302 = vmatpush1.msra.mxu0 0.0
        %303 = vmatprep.subr.mxu0 0.0
        %304 = vmatpush1.msra.mxu0 0.0
        %305 = vmatprep.mubr.f32.mxu0 0.0
        %306 = vmatmul.mubr.f32.gmra.mrb[0].mxu0 %v239
        %v307 = vpop.f32.mrb[0].mxu0
        %v308 = vadd.f32 %v235, %v307
        %v309 = vpop.f32.mrb[0].mxu0
        %v310 = vadd.f32 %v235, %v309
        %311 = vdwg.mxu0
        %v314 = vcombine.low %v308, %v310
        %316 = vst [vmem:[%s219] sm:$0xff] %v314
        %s317 = sand.u32 %s113, 1
        %s318 = scalar_lea.sflag [#allocation4], %s317
        %s319 = sand.u32 %s113, 1
        %s320 = smul.addr %s319, 8
        %s321 = scalar_lea.vmem [#allocation7], %s320
        // Predicated region
        $region41: #{tpu_custom_call.1} parent=31 // pred_check
          %p322 = pneg %p123
        $region42: #{tpu_custom_call.1} parent=31 // pred_check_branch
          %324 = sbr.rel (%p322) target = $region44
        $region43: #{tpu_custom_call.1} parent=31 // pred_region
          %s325 = smul.u32 2, %s26
          %s327 = ssub.s32 128, 128
          %328 = vsyncadd %s318, %s327
          %s329 = smul.addr %s25, 2
          %s330 = sadd.s32 %s325, %s329
          %s331 = smul.addr %s330, 64
          %s332 = scalar_lea.hbm %s3, %s331
          %s334 = sshll.u32 %s321, 4
          %s335 = int_to_ptr.vmem [resolvable:$true] %s334
          %337 = dma.vmem_to_hbm [thread:$0]  %s335, 128, %s332, %s318
        $region44: #{tpu_custom_call.1} parent=31 // pred_fallthru
          _
      $region32: #{tpu_custom_call.1} parent=5 // pred_fallthru
        _
      %p338 = scmp.le.s32.totalorder 2, %s16
      // Predicated region
      $region45: #{tpu_custom_call.1} parent=5 // pred_check
        %p339 = pneg %p338
      $region46: #{tpu_custom_call.1} parent=5 // pred_check_branch
        %341 = sbr.rel (%p339) target = $region48
      $region47: #{tpu_custom_call.1} parent=5 // pred_region
        %s342 = ssub.s32 %s16, 2
        // Predicated region
        $region49: #{tpu_custom_call.1} parent=47 // pred_check
          %p343 = pneg %p129
        $region50: #{tpu_custom_call.1} parent=47 // pred_check_branch
          %345 = sbr.rel (%p343) target = $region52
        $region51: #{tpu_custom_call.1} parent=47 // pred_region
          %s346 = sand.u32 %s114, 1
          %s347 = scalar_lea.sflag [#allocation4], %s346
          %s348 = sand.u32 %s114, 1
          %s349 = smul.addr %s348, 8
          %s350 = scalar_lea.vmem [#allocation7], %s349
          %351 = dma.done %s347, 128
        $region52: #{tpu_custom_call.1} parent=47 // pred_fallthru
          _
      $region48: #{tpu_custom_call.1} parent=5 // pred_fallthru
        _
    $region6: #{tpu_custom_call.1} parent=1 // loop_footer
      %s20 = sadd.s32 1, %s16
    $region7: #{tpu_custom_call.1} parent=1 // loop_footer_branch
      %15 = sbr.rel target = $region3
    $region8: #{tpu_custom_call.1} parent=1 // loop_exit
      _
    %352 = vsyncpa [#allocation3], 1
    %s353 = scalar_lea.sflag [#allocation3], 1
    %354 = vsyncpa %s353, 1
    %355 = vsyncpa [#allocation6], 1
    %356 = vsyncpa [#allocation4], 1
    %s357 = scalar_lea.sflag [#allocation4], 1
    %358 = vsyncpa %s357, 1

</llo_original>
